<compile_context>
chip_gen: v5e
topology: v5e:2x2
jax: 0.10.0
libtpu: 0.0.40
codegen_flags: <defaults>
</compile_context>

<pallas_src>
import functools

import jax
import jax.numpy as jnp
from jax.experimental import pallas as pl
from jax.experimental.pallas import tpu as pltpu


def _round_up(x, m):
    return ((x + m - 1) // m) * m


def _cdiv(a, b):
    return -(-a // b)


def prepare_weight(weight, compute_dtype=jnp.bfloat16):
    """One-time prep outside the per-call path: (n_words, H) -> (H, n_words), bf16."""
    return jnp.asarray(weight).T.astype(compute_dtype)


# -----------------------------------------------------------------------------
# Per-generation tuning.
# -----------------------------------------------------------------------------

def _tpu_generation():
    try:
        kind = jax.devices()[0].device_kind.lower()
    except Exception:
        return "v6e"
    if "v7" in kind:
        return "v7x"
    if "v6" in kind:
        return "v6e"
    if "v5p" in kind:
        return "v6e"          # v5p: large VMEM / MXU -> v6e-style tiling
    if "v5" in kind:
        return "v5e"
    if "v4" in kind or "v3" in kind or "v2" in kind:
        return "v5e"
    return "v6e"


#   tm1: pass-1 row-tile target  (weight-stream reuse ~= tm1 FLOP/byte)
#   tn1: pass-1 vocab-tile target
#   tm2: pass-2 row-tile cap     (pass 2 spends VMEM on the vocab tile instead)
#   tn2: pass-2 vocab-tile cap   (amortizes the x re-stream / spill read)
_GEN_TILES = {
    "v5e": dict(tm1=384,  tn1=512, tm2=320, tn2=4096),
    "v6e": dict(tm1=1024, tn1=512, tm2=320, tn2=4096),
    "v7x": dict(tm1=512,  tn1=512, tm2=320, tn2=2048),
}

# Hidden size above which spilling bf16 logits from pass 1 beats recomputing
# the matmul in pass 2 (2*M*N*H flops saved vs ~4*M*N bytes spilled).
_SPILL_MIN_H = {"v5e": 512, "v6e": 1344, "v7x": 640}


def _vmem_capacity_bytes(gen):
    try:
        return int(pltpu.get_tpu_info().vmem_capacity_bytes)
    except Exception:
        return (64 << 20) if gen == "v7x" else (128 << 20)


def _vmem_limit(working_set_bytes, gen):
    # Cap at 80% of physical VMEM (~51 MiB on v7x, ~100 MiB on v5e/v6e) so the
    # compiler keeps headroom for internal scratch / semaphores.
    cap = int(0.80 * _vmem_capacity_bytes(gen))
    want = int(working_set_bytes) + (6 << 20)
    return max(32 << 20, min(want, cap))


# -----------------------------------------------------------------------------
# Tile-size selection helpers.
# -----------------------------------------------------------------------------

def _balanced_tile(dim, target, quantum):
    """Tile ~= target, multiple of quantum, chosen so padding of `dim` is small."""
    dim = max(int(dim), 1)
    target = max(int(target), quantum)
    n = _cdiv(dim, target)
    return _round_up(_cdiv(dim, n), quantum)


def _divisor_tile(big, cap, quantum):
    """Largest divisor of `big` that is a multiple of `quantum` and <= cap."""
    if big <= cap:
        return big
    for k in range(2, big // quantum + 1):
        t = big // k
        if big % k == 0 and t % quantum == 0 and t <= cap:
            return t
    return quantum        # quantum divides big by construction


def _multiple_tile(base, count, cap):
    """Largest base*d <= cap with d | count (so the tile divides base*count)."""
    best = base
    for d in range(1, count + 1):
        if count % d == 0 and base * d <= cap:
            best = max(best, base * d)
    return best


# -----------------------------------------------------------------------------
# Kernels.
# -----------------------------------------------------------------------------

def _pass1_body(x_ref, wt_ref, mask_ref, lse_ref, m_sc, l_sc, tn, logits_ref=None):
    """Online running max / running sum over vocab tiles -> per-row logsumexp."""
    j = pl.program_id(1)

    @pl.when(j == 0)
    def _():
        # Finite sentinel (not -inf) so alpha = exp(m_old - m_new) is never NaN.
        m_sc[...] = jnp.full_like(m_sc, jnp.finfo(jnp.float32).min)
        l_sc[...] = jnp.zeros_like(l_sc)

    logits = jnp.dot(x_ref[...], wt_ref[...], preferred_element_type=jnp.float32)
    # Resident mask: one row per vocab tile, dynamically indexed (no per-step DMA).
    logits = logits + mask_ref[pl.ds(j, 1), :]

    if logits_ref is not None:            # bf16 logits spill (mask baked in)
        logits_ref[...] = logits.astype(logits_ref.dtype)

    m_new = jnp.maximum(m_sc[...], jnp.max(logits, axis=-1, keepdims=True))
    alpha = jnp.exp(m_sc[...] - m_new)
    p = jnp.exp(logits - m_new)
    l_sc[...] = alpha * l_sc[...] + jnp.sum(p, axis=-1, keepdims=True)
    m_sc[...] = m_new

    @pl.when(j == pl.num_programs(1) - 1)
    def _():
        lse_ref[...] = m_sc[...] + jnp.log(l_sc[...])


def _stats_kernel(x_ref, wt_ref, mask_ref, lse_ref, m_sc, l_sc, *, tn):
    _pass1_body(x_ref, wt_ref, mask_ref, lse_ref, m_sc, l_sc, tn)


def _stats_spill_kernel(x_ref, wt_ref, mask_ref, lse_ref, logits_ref, m_sc, l_sc, *, tn):
    _pass1_body(x_ref, wt_ref, mask_ref, lse_ref, m_sc, l_sc, tn, logits_ref)


def _write_kernel(x_ref, wt_ref, mask_ref, lse_ref, o_ref, *, log_probs):
    """Pass 2 (recompute): vocab axis OUTER so each W^T tile is DMA'd once."""
    n = pl.program_id(0)
    logits = jnp.dot(x_ref[...], wt_ref[...], preferred_element_type=jnp.float32)
    logits = logits + mask_ref[pl.ds(n, 1), :]
    z = logits - lse_ref[...]
    o_ref[...] = (z if log_probs else jnp.exp(z)).astype(o_ref.dtype)


def _normalize_kernel(logits_ref, lse_ref, o_ref, *, log_probs):
    """Pass 2 (spill): pure read -> normalize -> write, no matmul."""
    z = logits_ref[...].astype(jnp.float32) - lse_ref[...]
    o_ref[...] = (z if log_probs else jnp.exp(z)).astype(o_ref.dtype)


# -----------------------------------------------------------------------------
# Wrapper.
# -----------------------------------------------------------------------------

def generator_forward(x, weight_t, *, padding_idx=-1, log_probs=True,
                      out_dtype=jnp.float32, compute_dtype=jnp.bfloat16,
                      spill_logits=None, tm1=None, tn1=None, tm2=None, tn2=None):
    """x: (..., H).  weight_t: (H, n_words), already transposed (see prepare_weight)."""
    orig_shape = x.shape
    H = orig_shape[-1]
    assert weight_t.shape[0] == H
    N = weight_t.shape[1]

    gen = _tpu_generation()
    cfg = _GEN_TILES[gen]
    tm1_t = int(tm1) if tm1 is not None else cfg["tm1"]
    tn1_t = int(tn1) if tn1 is not None else cfg["tn1"]
    tm2_c = int(tm2) if tm2 is not None else cfg["tm2"]
    tn2_c = int(tn2) if tn2 is not None else cfg["tn2"]

    if spill_logits is None:
        spill_logits = H >= _SPILL_MIN_H[gen]
    spill_logits = bool(spill_logits)

    x2d = x.reshape(-1, H).astype(compute_dtype)
    wt = weight_t.astype(compute_dtype)
    M = x2d.shape[0]

    # --- tile selection: pass-1 tiles balanced against M / N; pass-2 tiles
    # chosen so they divide the SAME padded extents (one padded x / W^T / lse
    # serves both passes).
    tm1 = _balanced_tile(M, tm1_t, 16)
    tn1 = _balanced_tile(N, tn1_t, 128)
    num_m1, num_n1 = _cdiv(M, tm1), _cdiv(N, tn1)
    Mp, Np = tm1 * num_m1, tn1 * num_n1

    if Mp != M:
        x2d = jnp.pad(x2d, ((0, Mp - M), (0, 0)))
    if Np != N:
        wt = jnp.pad(wt, ((0, 0), (0, Np - N)))

    # Additive mask row: -inf at padding_idx and at vocab-padding columns.
    col = jnp.arange(Np)
    mask_row = jnp.where(col >= N, -jnp.inf, 0.0).astype(jnp.float32)
    if padding_idx != -1:
        mask_row = jnp.where(col == padding_idx, -jnp.inf, mask_row)

    cbytes = jnp.dtype(compute_dtype).itemsize
    obytes = jnp.dtype(out_dtype).itemsize

    # ---- Pass 1: per-row logsumexp (vocab axis inner, "arbitrary"). ----------
    mask1 = mask_row.reshape(num_n1, tn1)        # VMEM-resident, row-sliced in-kernel
    p1_bytes = (2 * tm1 * H * cbytes + 2 * H * tn1 * cbytes + 2 * Np * 4
                + 4 * tm1 * 4 + 3 * tm1 * tn1 * 4
                + (2 * tm1 * tn1 * cbytes if spill_logits else 0))
    p1_params = pltpu.CompilerParams(
        dimension_semantics=("parallel", "arbitrary"),
        vmem_limit_bytes=_vmem_limit(p1_bytes, gen))
    p1_in_specs = [
        pl.BlockSpec((tm1, H), lambda i, j: (i, 0)),
        pl.BlockSpec((H, tn1), lambda i, j: (0, j)),
        pl.BlockSpec((num_n1, tn1), lambda i, j: (0, 0)),   # resident mask
    ]
    lse_spec = pl.BlockSpec((tm1, 1), lambda i, j: (i, 0))
    p1_scratch = [pltpu.VMEM((tm1, 1), jnp.float32),
                  pltpu.VMEM((tm1, 1), jnp.float32)]

    logits_hbm = None
    if spill_logits:
        lse, logits_hbm = pl.pallas_call(
            functools.partial(_stats_spill_kernel, tn=tn1),
            out_shape=(jax.ShapeDtypeStruct((Mp, 1), jnp.float32),
                       jax.ShapeDtypeStruct((Mp, Np), compute_dtype)),
            grid_spec=pltpu.PrefetchScalarGridSpec(
                num_scalar_prefetch=0, grid=(num_m1, num_n1),
                in_specs=p1_in_specs,
                out_specs=[lse_spec,
                           pl.BlockSpec((tm1, tn1), lambda i, j: (i, j))],
                scratch_shapes=p1_scratch),
            compiler_params=p1_params,
        )(x2d, wt, mask1)
    else:
        lse = pl.pallas_call(
            functools.partial(_stats_kernel, tn=tn1),
            out_shape=jax.ShapeDtypeStruct((Mp, 1), jnp.float32),
            grid_spec=pltpu.PrefetchScalarGridSpec(
                num_scalar_prefetch=0, grid=(num_m1, num_n1),
                in_specs=p1_in_specs,
                out_specs=lse_spec,
                scratch_shapes=p1_scratch),
            compiler_params=p1_params,
        )(x2d, wt, mask1)

    # ---- Pass 2. --------------------------------------------------------------
    if spill_logits:
        # Pure read -> normalize -> write; everything streamed exactly once.
        tmS = tm1 if tm1 <= 512 else _divisor_tile(tm1, 512, 16)
        tnS = _multiple_tile(tn1, num_n1, max(tn2_c, tn1))
        p2_bytes = (2 * tmS * tnS * cbytes + 2 * tmS * tnS * obytes
                    + 2 * tmS * tnS * 4 + 4 * tmS * 4)
        out = pl.pallas_call(
            functools.partial(_normalize_kernel, log_probs=log_probs),
            out_shape=jax.ShapeDtypeStruct((Mp, Np), out_dtype),
            grid_spec=pltpu.PrefetchScalarGridSpec(
                num_scalar_prefetch=0, grid=(Mp // tmS, Np // tnS),
                in_specs=[pl.BlockSpec((tmS, tnS), lambda m, n: (m, n)),
                          pl.BlockSpec((tmS, 1), lambda m, n: (m, 0))],
                out_specs=pl.BlockSpec((tmS, tnS), lambda m, n: (m, n))),
            compiler_params=pltpu.CompilerParams(
                dimension_semantics=("parallel", "parallel"),
                vmem_limit_bytes=_vmem_limit(p2_bytes, gen)),
        )(logits_hbm, lse)
    else:
        # Recompute logits with the vocab axis OUTER so each (large) W^T tile is
        # DMA'd exactly once and x is re-streamed only once per wide vocab tile.
        tm2 = _divisor_tile(tm1, max(tm2_c, 16), 16)
        tn2 = _multiple_tile(tn1, num_n1, max(tn2_c, tn1))
        num_m2, num_n2 = Mp // tm2, Np // tn2
        mask2 = mask_row.reshape(num_n2, tn2)
        p2_bytes = (2 * tm2 * H * cbytes + 2 * H * tn2 * cbytes + 2 * Np * 4
                    + 2 * tm2 * 4 + 2 * tm2 * tn2 * obytes + 3 * tm2 * tn2 * 4)
        out = pl.pallas_call(
            functools.partial(_write_kernel, log_probs=log_probs),
            out_shape=jax.ShapeDtypeStruct((Mp, Np), out_dtype),
            grid_spec=pltpu.PrefetchScalarGridSpec(
                num_scalar_prefetch=0, grid=(num_n2, num_m2),
                in_specs=[pl.BlockSpec((tm2, H), lambda n, m: (m, 0)),
                          pl.BlockSpec((H, tn2), lambda n, m: (0, n)),
                          pl.BlockSpec((num_n2, tn2), lambda n, m: (0, 0)),
                          pl.BlockSpec((tm2, 1), lambda n, m: (m, 0))],
                out_specs=pl.BlockSpec((tm2, tn2), lambda n, m: (m, n))),
            compiler_params=pltpu.CompilerParams(
                dimension_semantics=("parallel", "parallel"),
                vmem_limit_bytes=_vmem_limit(p2_bytes, gen)),
        )(x2d, wt, mask2, lse)

    out = out[:M, :N]
    return out.reshape(*orig_shape[:-1], N)


if __name__ == "__main__":
    # Small shapes implied by the module: (batch, seq, hidden) -> (batch, seq, n_words)
    B, T, H, N_WORDS = 2, 8, 32, 256
    PADDING_IDX = 3

    key = jax.random.PRNGKey(0)
    kx, kw = jax.random.split(key)
    x = jax.random.normal(kx, (B, T, H), dtype=jnp.float32)
    # nn.Linear weight layout: (n_words, hidden_size)
    weight = (jax.random.normal(kw, (N_WORDS, H), dtype=jnp.float32)
              * (1.0 / jnp.sqrt(H)))

    wt = prepare_weight(weight)                      # (H, N_WORDS) bf16

    # Reference: same bf16 matmul with f32 accumulation, then f32 (log-)softmax.
    logits_ref = jnp.einsum("bth,hn->btn", x.astype(jnp.bfloat16), wt,
                            preferred_element_type=jnp.float32)
    mask_ref = jnp.where(jnp.arange(N_WORDS) == PADDING_IDX, -jnp.inf, 0.0)
    logits_ref = logits_ref + mask_ref
    ref_lp = jax.nn.log_softmax(logits_ref, axis=-1)
    ref_sm = jax.nn.softmax(logits_ref, axis=-1)

    def close(a, b, tol=1e-4):
        finite = jnp.isfinite(b)
        return bool(jnp.allclose(jnp.where(finite, a, 0.0),
                                 jnp.where(finite, b, 0.0),
                                 atol=tol, rtol=tol))

    # 1) log-probs, auto tiles (recompute path at this H on every generation).
    out_lp = generator_forward(x, wt, padding_idx=PADDING_IDX, log_probs=True)
    jax.block_until_ready(out_lp)
    assert out_lp.shape == (B, T, N_WORDS)
    assert close(out_lp, ref_lp)
    assert bool(jnp.all(out_lp[..., PADDING_IDX] == -jnp.inf))

    # 2) softmax branch (log_probs=False).
    out_sm = generator_forward(x, wt, padding_idx=PADDING_IDX, log_probs=False)
    jax.block_until_ready(out_sm)
    assert close(out_sm, ref_sm)
    assert bool(jnp.all(out_sm[..., PADDING_IDX] == 0.0))

    # 3) multi-vocab-tile path (exercises online running-max/sum and the
    #    vocab-outer pass-2 loop).
    out_mt = generator_forward(x, wt, padding_idx=PADDING_IDX, log_probs=True,
                               tn1=128, tn2=128)
    jax.block_until_ready(out_mt)
    assert close(out_mt, ref_lp)
    assert bool(jnp.all(out_mt[..., PADDING_IDX] == -jnp.inf))

    # 4) bf16-logits-spill path (forced; auto-enabled only on v5e/v7x at large H).
    #    Reference applies the same bf16 rounding to the spilled logits.
    ref_spill = (logits_ref.astype(jnp.bfloat16).astype(jnp.float32)
                 - jax.nn.logsumexp(logits_ref, axis=-1, keepdims=True))
    out_sp = generator_forward(x, wt, padding_idx=PADDING_IDX, log_probs=True,
                               spill_logits=True, tn1=128)
    jax.block_until_ready(out_sp)
    assert close(out_sp, ref_spill, tol=1e-2)
    assert bool(jnp.all(out_sp[..., PADDING_IDX] == -jnp.inf))

    # 5) non-multiple M (row padding path).
    x_odd = x[:, :5, :]
    out_odd = generator_forward(x_odd, wt, padding_idx=PADDING_IDX, log_probs=True)
    jax.block_until_ready(out_odd)
    assert out_odd.shape == (B, 5, N_WORDS)
    assert close(out_odd, ref_lp[:, :5, :])

    print("KERNEL_OK")
</pallas_src>

<mosaic_0001>
module attributes {stable_mosaic.version = 11 : i64} {
  func.func @_stats_kernel(%arg0: i32, %arg1: i32, %arg2: memref<16x32xbf16, #tpu.memory_space<vmem>>, %arg3: memref<32x256xbf16, #tpu.memory_space<vmem>>, %arg4: memref<1x256xf32, #tpu.memory_space<vmem>>, %arg5: memref<16x1xf32, #tpu.memory_space<vmem>>, %arg6: memref<16x1xf32, #tpu.memory_space<vmem>>, %arg7: memref<16x1xf32, #tpu.memory_space<vmem>>) attributes {dimension_semantics = [#tpu.dimension_semantics<parallel>, #tpu.dimension_semantics<arbitrary>], iteration_bounds = array<i64: 1, 1>, scalar_prefetch = 0 : i64, scratch_operands = 2 : i64, tpu.core_type = #tpu.core_type<tc>, window_params = [{transform_indices = @transform_0, window_bounds = array<i64: 16, 32>}, {transform_indices = @transform_1, window_bounds = array<i64: 32, 256>}, {pipeline_mode = #tpu.pipeline_mode<synchronous>, transform_indices = @transform_2, window_bounds = array<i64: 1, 256>}, {transform_indices = @transform_3, window_bounds = array<i64: 16, 1>}]} {
    %c0_i32 = arith.constant 0 : i32
    %0 = arith.cmpi eq, %arg1, %c0_i32 : i32
    %1 = arith.extui %0 : i1 to i32
    %c0_i32_0 = arith.constant 0 : i32
    %2 = arith.cmpi ne, %1, %c0_i32_0 : i32
    scf.if %2 {
      %cst_19 = arith.constant -3.40282347E+38 : f32
      %30 = vector.broadcast %cst_19 : f32 to vector<16x1xf32>
      %c0_20 = arith.constant 0 : index
      %c0_21 = arith.constant 0 : index
      %31 = vector.load %arg6[%c0_20, %c0_21] : memref<16x1xf32, #tpu.memory_space<vmem>>, vector<16x1xf32>
      tpu.vector_store %arg6[%c0_20, %c0_21], %30 {strides = array<i32>} : memref<16x1xf32, #tpu.memory_space<vmem>>, vector<16x1xf32>,
      %cst_22 = arith.constant 0.000000e+00 : f32
      %32 = vector.broadcast %cst_22 : f32 to vector<16x1xf32>
      %c0_23 = arith.constant 0 : index
      %c0_24 = arith.constant 0 : index
      %33 = vector.load %arg7[%c0_23, %c0_24] : memref<16x1xf32, #tpu.memory_space<vmem>>, vector<16x1xf32>
      tpu.vector_store %arg7[%c0_23, %c0_24], %32 {strides = array<i32>} : memref<16x1xf32, #tpu.memory_space<vmem>>, vector<16x1xf32>,
    } else {
    }
    %c0 = arith.constant 0 : index
    %c0_1 = arith.constant 0 : index
    %3 = vector.load %arg2[%c0, %c0_1] : memref<16x32xbf16, #tpu.memory_space<vmem>>, vector<16x32xbf16>
    %c0_2 = arith.constant 0 : index
    %c0_3 = arith.constant 0 : index
    %4 = vector.load %arg3[%c0_2, %c0_3] : memref<32x256xbf16, #tpu.memory_space<vmem>>, vector<32x256xbf16>
    %cst = arith.constant dense<0.000000e+00> : vector<16x256xf32>
    %5 = tpu.matmul %3, %4, %cst {dimension_numbers = #tpu.dot_dimension_numbers<[1], [0], [0], [1], [0, 0, 1, 1], [], []>} : vector<16x32xbf16>, vector<32x256xbf16>, vector<16x256xf32> -> vector<16x256xf32>
    %6 = arith.index_cast %arg1 : i32 to index
    %c0_4 = arith.constant 0 : index
    %7 = vector.load %arg4[%6, %c0_4] : memref<1x256xf32, #tpu.memory_space<vmem>>, vector<1x256xf32>
    %8 = vector.broadcast %7 : vector<1x256xf32> to vector<16x256xf32>
    %9 = arith.addf %5, %8 : vector<16x256xf32>
    %c0_5 = arith.constant 0 : index
    %c0_6 = arith.constant 0 : index
    %10 = vector.load %arg6[%c0_5, %c0_6] : memref<16x1xf32, #tpu.memory_space<vmem>>, vector<16x1xf32>
    %cst_7 = arith.constant dense<0xFF800000> : vector<16xf32>
    %11 = vector.multi_reduction <maximumf>, %9, %cst_7 [1] : vector<16x256xf32> to vector<16xf32>
    %12 = vector.shape_cast %11 : vector<16xf32> to vector<16x1xf32>
    %13 = arith.maximumf %10, %12 : vector<16x1xf32>
    %c0_8 = arith.constant 0 : index
    %c0_9 = arith.constant 0 : index
    %14 = vector.load %arg6[%c0_8, %c0_9] : memref<16x1xf32, #tpu.memory_space<vmem>>, vector<16x1xf32>
    %15 = arith.subf %14, %13 : vector<16x1xf32>
    %16 = math.exp %15 : vector<16x1xf32>
    %17 = vector.broadcast %13 : vector<16x1xf32> to vector<16x256xf32>
    %18 = arith.subf %9, %17 : vector<16x256xf32>
    %19 = math.exp %18 : vector<16x256xf32>
    %c0_10 = arith.constant 0 : index
    %c0_11 = arith.constant 0 : index
    %20 = vector.load %arg7[%c0_10, %c0_11] : memref<16x1xf32, #tpu.memory_space<vmem>>, vector<16x1xf32>
    %21 = arith.mulf %16, %20 : vector<16x1xf32>
    %cst_12 = arith.constant dense<0.000000e+00> : vector<16xf32>
    %22 = vector.multi_reduction <add>, %19, %cst_12 [1] : vector<16x256xf32> to vector<16xf32>
    %23 = vector.shape_cast %22 : vector<16xf32> to vector<16x1xf32>
    %24 = arith.addf %21, %23 : vector<16x1xf32>
    %c0_13 = arith.constant 0 : index
    %c0_14 = arith.constant 0 : index
    %25 = vector.load %arg7[%c0_13, %c0_14] : memref<16x1xf32, #tpu.memory_space<vmem>>, vector<16x1xf32>
    tpu.vector_store %arg7[%c0_13, %c0_14], %24 {strides = array<i32>} : memref<16x1xf32, #tpu.memory_space<vmem>>, vector<16x1xf32>,
    %c0_15 = arith.constant 0 : index
    %c0_16 = arith.constant 0 : index
    %26 = vector.load %arg6[%c0_15, %c0_16] : memref<16x1xf32, #tpu.memory_space<vmem>>, vector<16x1xf32>
    tpu.vector_store %arg6[%c0_15, %c0_16], %13 {strides = array<i32>} : memref<16x1xf32, #tpu.memory_space<vmem>>, vector<16x1xf32>,
    %c0_i32_17 = arith.constant 0 : i32
    %27 = arith.cmpi eq, %arg1, %c0_i32_17 : i32
    %28 = arith.extui %27 : i1 to i32
    %c0_i32_18 = arith.constant 0 : i32
    %29 = arith.cmpi ne, %28, %c0_i32_18 : i32
    scf.if %29 {
      %c0_19 = arith.constant 0 : index
      %c0_20 = arith.constant 0 : index
      %30 = vector.load %arg6[%c0_19, %c0_20] : memref<16x1xf32, #tpu.memory_space<vmem>>, vector<16x1xf32>
      %c0_21 = arith.constant 0 : index
      %c0_22 = arith.constant 0 : index
      %31 = vector.load %arg7[%c0_21, %c0_22] : memref<16x1xf32, #tpu.memory_space<vmem>>, vector<16x1xf32>
      %32 = math.log %31 : vector<16x1xf32>
      %33 = arith.addf %30, %32 : vector<16x1xf32>
      %c0_23 = arith.constant 0 : index
      %c0_24 = arith.constant 0 : index
      %34 = vector.load %arg5[%c0_23, %c0_24] : memref<16x1xf32, #tpu.memory_space<vmem>>, vector<16x1xf32>
      tpu.vector_store %arg5[%c0_23, %c0_24], %33 {strides = array<i32>} : memref<16x1xf32, #tpu.memory_space<vmem>>, vector<16x1xf32>,
    } else {
    }
    return
  }
  func.func @transform_0(%arg0: i32, %arg1: i32) -> (i32, i32) {
    %c0_i32 = arith.constant 0 : i32
    %c0_i32_0 = arith.constant 0 : i32
    return %arg0, %c0_i32 : i32, i32
  }
  func.func @transform_1(%arg0: i32, %arg1: i32) -> (i32, i32) {
    %c0_i32 = arith.constant 0 : i32
    %c0_i32_0 = arith.constant 0 : i32
    return %c0_i32, %arg1 : i32, i32
  }
  func.func @transform_2(%arg0: i32, %arg1: i32) -> (i32, i32) {
    %c0_i32 = arith.constant 0 : i32
    %c0_i32_0 = arith.constant 0 : i32
    %c0_i32_1 = arith.constant 0 : i32
    return %c0_i32, %c0_i32_0 : i32, i32
  }
  func.func @transform_3(%arg0: i32, %arg1: i32) -> (i32, i32) {
    %c0_i32 = arith.constant 0 : i32
    %c0_i32_0 = arith.constant 0 : i32
    return %arg0, %c0_i32 : i32, i32
  }
}

</mosaic_0001>

<llo_original>
// kernel: tpu_custom_call.1
$region0: #{tpu_custom_call.1}
  #allocation0 [shape = 'u32[]', space=smem, size = 0x4, offset = 0x4, fixed_abs, tag = 'smem constant byte address 0x4 - core index']
  #allocation1 [shape = 'u32[72,128]{1,0:T(1,128)}', space=vmem, size = 0x9000, scoped, tag = 'internal scratch']
  #allocation2 [shape = 'f32[16,1]{1,0:T(8,128)}', space=vmem, size = 0x2000, scoped, tag = 'scratch operand']
  #allocation3 [shape = 'f32[16,1]{1,0:T(8,128)}', space=vmem, size = 0x2000, scoped, tag = 'scratch operand']
  %s0 = inlined_call_operand.hbm [shape: bf16[16,32], index: 0, kind: input, shape index: {}]
  %s1 = inlined_call_operand.hbm [shape: bf16[32,256], index: 1, kind: input, shape index: {}]
  %s2 = inlined_call_operand.hbm [shape: f32[1,256], index: 2, kind: input, shape index: {}]
  %s3 = inlined_call_operand.vmem [shape: f32[16,1], index: 3, kind: output, shape index: {}]
  %s4 = sld [smem:[#allocation0]]
  $region42: #{tpu_custom_call.1} parent=0
    _
  %s6 = ssub.s32 1, %s4
  %s7 = scalar_select 0, %s6, %s4
  $region1: #{tpu_custom_call.1} parent=0
    #allocation4 [shape = 'u8[4096]{0}', space=vmem, size = 0x1000, scoped, tag = 'input window, operand 0, single buffered']
    #allocation5 [shape = 's32[1]{0}', space=sflag, size = 0x4, scoped, tag = 'scoped memory for tpu_custom_call.1']
    #allocation6 [shape = 'u8[16384]{0}', space=vmem, size = 0x4000, scoped, tag = 'input window, operand 1, single buffered']
    #allocation7 [shape = 's32[1]{0}', space=sflag, size = 0x4, scoped, tag = 'scoped memory for tpu_custom_call.1']
    #allocation8 [shape = 'u8[1024]{0}', space=vmem, size = 0x400, scoped, tag = 'input window, operand 2, single buffered']
    %8 = vsyncpa [#allocation5], 0
    %9 = vsyncpa [#allocation7], 0
    // Predicated region
    $region2: #{tpu_custom_call.1} parent=1 // pred_check
      _
    $region3: #{tpu_custom_call.1} parent=1 // pred_check_branch
      %11 = sbr.rel (0) target = $region5
    $region4: #{tpu_custom_call.1} parent=1 // pred_region
      %13 = vsyncadd [#allocation5], 0
      %s14 = sshll.u32 %s0, 4
      %s15 = int_to_ptr.hbm [resolvable:$true] %s14
      %s16 = sshll.u32 [#allocation4], 4
      %s17 = int_to_ptr.vmem [resolvable:$true] %s16
      %22 = dma.hbm_to_vmem [thread:$0]  %s15, 128, %s17, [#allocation5], 64, 64, 4
    $region5: #{tpu_custom_call.1} parent=1 // pred_fallthru
      _
    // Predicated region
    $region6: #{tpu_custom_call.1} parent=1 // pred_check
      _
    $region7: #{tpu_custom_call.1} parent=1 // pred_check_branch
      %24 = sbr.rel (0) target = $region9
    $region8: #{tpu_custom_call.1} parent=1 // pred_region
      %26 = vsyncadd [#allocation7], 0
      %s27 = sshll.u32 %s1, 4
      %s28 = int_to_ptr.hbm [resolvable:$true] %s27
      %s29 = sshll.u32 [#allocation6], 4
      %s30 = int_to_ptr.vmem [resolvable:$true] %s29
      %35 = dma.hbm_to_vmem [thread:$0]  %s28, 512, %s30, [#allocation7], 128, 128, 8
    $region9: #{tpu_custom_call.1} parent=1 // pred_fallthru
      _
    // Predicated region
    $region10: #{tpu_custom_call.1} parent=1 // pred_check
      _
    $region11: #{tpu_custom_call.1} parent=1 // pred_check_branch
      %37 = sbr.rel (0) target = $region13
    $region12: #{tpu_custom_call.1} parent=1 // pred_region
      %39 = vsyncadd [#allocation7], 0
      %s41 = sshll.u32 %s2, 4
      %s42 = int_to_ptr.hbm [resolvable:$true] %s41
      %s43 = sshll.u32 [#allocation8], 4
      %s44 = int_to_ptr.vmem [resolvable:$true] %s43
      %46 = dma.hbm_to_vmem [thread:$0]  %s42, 32, %s44, [#allocation7]
    $region13: #{tpu_custom_call.1} parent=1 // pred_fallthru
      _
    // Predicated region
    $region14: #{tpu_custom_call.1} parent=1 // pred_check
      _
    $region15: #{tpu_custom_call.1} parent=1 // pred_check_branch
      %48 = sbr.rel (0) target = $region17
    $region16: #{tpu_custom_call.1} parent=1 // pred_region
      %50 = dma.done [#allocation5], 128
    $region17: #{tpu_custom_call.1} parent=1 // pred_fallthru
      _
    // Predicated region
    $region18: #{tpu_custom_call.1} parent=1 // pred_check
      _
    $region19: #{tpu_custom_call.1} parent=1 // pred_check_branch
      %52 = sbr.rel (0) target = $region21
    $region20: #{tpu_custom_call.1} parent=1 // pred_region
      %54 = dma.done [#allocation7], 512
    $region21: #{tpu_custom_call.1} parent=1 // pred_fallthru
      _
    // Predicated region
    $region22: #{tpu_custom_call.1} parent=1 // pred_check
      _
    $region23: #{tpu_custom_call.1} parent=1 // pred_check_branch
      %56 = sbr.rel (0) target = $region25
    $region24: #{tpu_custom_call.1} parent=1 // pred_region
      %58 = dma.done [#allocation7], 32
    $region25: #{tpu_custom_call.1} parent=1 // pred_fallthru
      _
    %p60 = scmp.eq.s32.totalorder 0, 0
    // Predicated region
    $region26: #{tpu_custom_call.1} parent=1 // pred_check
      %p61 = pneg %p60
    $region27: #{tpu_custom_call.1} parent=1 // pred_check_branch
      %63 = sbr.rel (%p61) target = $region29
    $region28: #{tpu_custom_call.1} parent=1 // pred_region
      %vm64 = vcmask 7168
      %65 = vst.msk [vmem:[#allocation2] sm:$0xff] %vm64, -3.4028235e+38
      %66 = vst.msk [vmem:[#allocation2 + $0x8] sm:$0xff] %vm64, -3.4028235e+38
      %67 = vst.msk [vmem:[#allocation3] sm:$0xff] %vm64, 0.0
      %68 = vst.msk [vmem:[#allocation3 + $0x8] sm:$0xff] %vm64, 0.0
    $region29: #{tpu_custom_call.1} parent=1 // pred_fallthru
      _
    %v69 = vld [vmem:[#allocation4] sm:$0xf]
    %v70 = vld [vmem:[#allocation4 + $0x4] sm:$0xf]
    %v71 = vld [vmem:[#allocation6] sm:$0xff]
    %v72 = vld [vmem:[#allocation6 + $0x8] sm:$0xff]
    %v73 = vld [vmem:[#allocation6 + $0x10] sm:$0xff]
    %v74 = vld [vmem:[#allocation6 + $0x18] sm:$0xff]
    %s75 = smul.u32 0, 2
    %s76 = scalar_lea.vmem [#allocation8], %s75
    %v77 = vld [vmem:[%s76] sm:$0x3]
    %v79 = vperm.slane %v77, 0
    %v80 = vperm.slane %v77, 1
    %v85 = vunpack.c.l.b16 %v69
    %v86 = vunpack.c.l.b16 %v70
    %v87 = vpack.c.b16 %v86, %v85
    %v92 = vunpack.c.l.b16 %v71
    %v93 = vunpack.c.h.b16 %v71
    %v94 = vunpack.c.l.b16 %v72
    %v95 = vunpack.c.h.b16 %v72
    %v96 = vunpack.c.l.b16 %v73
    %v97 = vunpack.c.h.b16 %v73
    %v98 = vunpack.c.l.b16 %v74
    %v99 = vunpack.c.h.b16 %v74
    %v100 = vpack.c.b16 %v94, %v92
    %v101 = vpack.c.b16 %v95, %v93
    %v102 = vpack.c.b16 %v98, %v96
    %v103 = vpack.c.b16 %v99, %v97
    %vm108 = vcmask 261120
    %v110 = vsel %vm108, %v87, 0
    %112 = vmatpush.bf16.msra.mxu0 0
    %113 = vmatpush.bf16.msra.mxu0 0
    %114 = vmatpush.bf16.msra.mxu0 0
    %115 = vmatpush.bf16.msra.mxu0 0
    %116 = vmatpush.bf16.msra.mxu0 0
    %117 = vmatpush.bf16.msra.mxu0 0
    %118 = vmatpush.bf16.msra.mxu0 %v102
    %119 = vmatpush.bf16.msra.mxu0 %v100
    %120 = vmatmul.bf16.gmra.mxu0 %v110
    %v121 = vpop.f32.mrf.mxu0
    %v122 = vadd.f32 %v79, %v121
    %v123 = vpop.f32.mrf.mxu0
    %v124 = vadd.f32 %v79, %v123
    %125 = vdwg.mxu0
    %126 = vmatpush.bf16.msra.mxu0 0
    %127 = vmatpush.bf16.msra.mxu0 0
    %128 = vmatpush.bf16.msra.mxu0 0
    %129 = vmatpush.bf16.msra.mxu0 0
    %130 = vmatpush.bf16.msra.mxu0 0
    %131 = vmatpush.bf16.msra.mxu0 0
    %132 = vmatpush.bf16.msra.mxu0 %v103
    %133 = vmatpush.bf16.msra.mxu0 %v101
    %134 = vmatmul.bf16.gmra.mxu0 %v110
    %v135 = vpop.f32.mrf.mxu0
    %v136 = vadd.f32 %v80, %v135
    %v137 = vpop.f32.mrf.mxu0
    %v138 = vadd.f32 %v80, %v137
    %139 = vdwg.mxu0
    %v140 = vld [vmem:[#allocation2] sm:$0xff]
    %v141 = vld [vmem:[#allocation2 + $0x8] sm:$0xff]
    %v142 = vmax.f32 %v122, %v136
    %143 = vmax.xlane.f32.xlu0 %v142
    %v144 = vpop.xlane.xlu0 %143
    %v145 = vmax.f32 %v124, %v138
    %146 = vmax.xlane.f32.xlu0 %v145
    %v147 = vpop.xlane.xlu0 %146
    %v148 = vmax.f32 %v140, %v144
    %v149 = vmax.f32 %v141, %v147
    %v150 = vsub.f32 %v140, %v148
    %v151 = vsub.f32 %v141, %v149
    %v152 = vmul.f32 %v150, 1.442695
    %v153 = vpow.pop %v152
    %v154 = vmul.f32 %v151, 1.442695
    %v155 = vpow.pop %v154
    %157 = vset.pattern.permute.xlu0 0
    %158 = vperm.xlu0 %157, %v148
    %v159 = vpop.permute.xlu0 %158
    %162 = vset.pattern.permute.xlu0 0
    %163 = vperm.xlu0 %162, %v149
    %v164 = vpop.permute.xlu0 %163
    %v166 = vsub.f32 %v122, %v159
    %v167 = vsub.f32 %v136, %v159
    %v168 = vsub.f32 %v124, %v164
    %v169 = vsub.f32 %v138, %v164
    %v170 = vmul.f32 %v166, 1.442695
    %v171 = vpow.pop %v170
    %v172 = vmul.f32 %v167, 1.442695
    %v173 = vpow.pop %v172
    %v174 = vmul.f32 %v168, 1.442695
    %v175 = vpow.pop %v174
    %v176 = vmul.f32 %v169, 1.442695
    %v177 = vpow.pop %v176
    %v178 = vld [vmem:[#allocation3] sm:$0xff]
    %v179 = vld [vmem:[#allocation3 + $0x8] sm:$0xff]
    %v180 = vmul.f32 %v153, %v178
    %v181 = vmul.f32 %v155, %v179
    %v182 = vadd.f32 %v171, %v173
    %183 = vadd.xlane.f32.xlu0 %v182
    %v184 = vpop.xlane.xlu0 %183
    %v185 = vadd.f32 %v175, %v177
    %186 = vadd.xlane.f32.xlu0 %v185
    %v187 = vpop.xlane.xlu0 %186
    %v188 = vadd.f32 %v180, %v184
    %v189 = vadd.f32 %v181, %v187
    %vm190 = vcmask 7168
    %191 = vst.msk [vmem:[#allocation3] sm:$0xff] %vm190, %v188
    %192 = vst.msk [vmem:[#allocation3 + $0x8] sm:$0xff] %vm190, %v189
    %193 = vst.msk [vmem:[#allocation2] sm:$0xff] %vm190, %v148
    %194 = vst.msk [vmem:[#allocation2 + $0x8] sm:$0xff] %vm190, %v149
    // Predicated region
    $region30: #{tpu_custom_call.1} parent=1 // pred_check
      %p195 = pneg %p60
    $region31: #{tpu_custom_call.1} parent=1 // pred_check_branch
      %197 = sbr.rel (%p195) target = $region33
    $region32: #{tpu_custom_call.1} parent=1 // pred_region
      %v198 = vld [vmem:[#allocation2] sm:$0xff]
      %v199 = vld [vmem:[#allocation2 + $0x8] sm:$0xff]
      %v200 = vld [vmem:[#allocation3] sm:$0xff]
      %v201 = vld [vmem:[#allocation3 + $0x8] sm:$0xff]
      %v202 = vlog2.pop %v200
      %v203 = vmul.f32 %v202, 0.6931472
      %v204 = vlog2.pop %v201
      %v205 = vmul.f32 %v204, 0.6931472
      %v206 = vadd.f32 %v198, %v203
      %v207 = vadd.f32 %v199, %v205
      %208 = vst.msk [vmem:[%s3] sm:$0xff] %vm190, %v206
      %209 = vst.msk [vmem:[%s3 + $0x8] sm:$0xff] %vm190, %v207
    $region33: #{tpu_custom_call.1} parent=1 // pred_fallthru
      _
    // Predicated region
    $region34: #{tpu_custom_call.1} parent=1 // pred_check
      _
    $region35: #{tpu_custom_call.1} parent=1 // pred_check_branch
      %211 = sbr.rel (0) target = $region37
    $region36: #{tpu_custom_call.1} parent=1 // pred_region
      _
    $region37: #{tpu_custom_call.1} parent=1 // pred_fallthru
      _
    // Predicated region
    $region38: #{tpu_custom_call.1} parent=1 // pred_check
      _
    $region39: #{tpu_custom_call.1} parent=1 // pred_check_branch
      %213 = sbr.rel (0) target = $region41
    $region40: #{tpu_custom_call.1} parent=1 // pred_region
      _
    $region41: #{tpu_custom_call.1} parent=1 // pred_fallthru
      _
    %214 = vsyncpa [#allocation5], 1
    %215 = vsyncpa [#allocation7], 1

</llo_original>
